<compile_context>
chip_gen: v6e
topology: v6e:2x2x1
jax: 0.10.0
libtpu: 0.0.40
codegen_flags: <defaults>
</compile_context>

<pallas_src>
import math

import jax
import jax.numpy as jnp
from jax.experimental import pallas as pl
from jax.experimental.pallas import tpu as pltpu


def _round_up(x, m):
    return (x + m - 1) // m * m


# ---------------------------------------------------------------------------
# Pallas kernel: one row-tile of the FCBlock MLP.
#   x_ref  : [tm, P]      input features (compute dtype, zero-padded columns)
#   wh_ref : [L, P, P]    stacked hidden-layer weights (rows=in, cols=out)
#   bh_ref : [L, 1, P]    stacked hidden-layer biases (f32)
#   wo_ref : [1, P]       final-layer weight row (f32)     (d_out == 1 path)
#            [P, d_out]   final-layer weight matrix (f32)  (general path)
#   bo_ref : [1, d_out]   final-layer bias (f32)
#   o_ref  : [tm, d_out]  output (f32)
# ---------------------------------------------------------------------------
def _fcblock_kernel(x_ref, wh_ref, bh_ref, wo_ref, bo_ref, o_ref):
    compute_dtype = x_ref.dtype
    n_layers = wh_ref.shape[0]          # static
    d_out = o_ref.shape[-1]             # static

    h = x_ref[...]
    for l in range(n_layers):           # static unroll; weights differ per layer
        acc = jnp.dot(h, wh_ref[l], preferred_element_type=jnp.float32)
        acc = acc + bh_ref[l]
        h = jnp.maximum(acc, 0.0).astype(compute_dtype)

    hf = h.astype(jnp.float32)
    if d_out == 1:
        # N=1 matmul wastes the MXU: do it on the VPU + lane reduction instead.
        out = jnp.sum(hf * wo_ref[...], axis=-1, keepdims=True) + bo_ref[...]
    else:
        out = jnp.dot(h, wo_ref[...].astype(compute_dtype),
                      preferred_element_type=jnp.float32) + bo_ref[...]
    o_ref[...] = out.astype(o_ref.dtype)


# ---------------------------------------------------------------------------
# Wrapper: padding / packing / pallas_call.
# ---------------------------------------------------------------------------
def fcblock_forward(coords, params, *, tm=1024, compute_dtype=jnp.bfloat16):
    """coords: [..., in_features]; params: list of (W:(in,out), b:(out,) or (1,out))."""
    lead = coords.shape[:-1]
    in_features = coords.shape[-1]
    x = coords.reshape(-1, in_features).astype(jnp.float32)
    M = x.shape[0]

    hidden = params[0][0].shape[1]
    d_out = params[-1][0].shape[1]
    n_hidden = len(params) - 1          # layers followed by ReLU

    # Common lane-aligned width for input features and hidden units.
    P = max(_round_up(in_features, 128), _round_up(hidden, 128))

    # Row tile: big tiles amortize per-step pipeline overhead; cap by the
    # (rounded-up) row count so tiny inputs don't over-pad.
    tm = max(8, min(tm, _round_up(M, 8)))
    M_pad = _round_up(M, tm)

    # Pad + cast the input once in the wrapper.
    x_pad = jnp.zeros((M_pad, P), compute_dtype)
    x_pad = x_pad.at[:M, :in_features].set(x.astype(compute_dtype))

    # Pack hidden-layer weights/biases into single stacked (zero-padded) arrays.
    wh = jnp.zeros((n_hidden, P, P), compute_dtype)
    bh = jnp.zeros((n_hidden, 1, P), jnp.float32)
    for l, (w, b) in enumerate(params[:-1]):
        wh = wh.at[l, :w.shape[0], :w.shape[1]].set(w.astype(compute_dtype))
        bh = bh.at[l, 0, :w.shape[1]].set(b.reshape(-1).astype(jnp.float32))

    w_last, b_last = params[-1]
    if d_out == 1:
        wo = jnp.zeros((1, P), jnp.float32)
        wo = wo.at[0, :w_last.shape[0]].set(w_last.reshape(-1).astype(jnp.float32))
    else:
        wo = jnp.zeros((P, d_out), jnp.float32)
        wo = wo.at[:w_last.shape[0], :].set(w_last.astype(jnp.float32))
    bo = b_last.reshape(1, d_out).astype(jnp.float32)

    grid = (M_pad // tm,)
    out = pl.pallas_call(
        _fcblock_kernel,
        out_shape=jax.ShapeDtypeStruct((M_pad, d_out), jnp.float32),
        grid_spec=pltpu.PrefetchScalarGridSpec(
            num_scalar_prefetch=0,
            grid=grid,
            in_specs=[
                pl.BlockSpec((tm, P), lambda i: (i, 0)),
                pl.BlockSpec(wh.shape, lambda i: (0, 0, 0)),
                pl.BlockSpec(bh.shape, lambda i: (0, 0, 0)),
                pl.BlockSpec(wo.shape, lambda i: (0, 0)),
                pl.BlockSpec(bo.shape, lambda i: (0, 0)),
            ],
            out_specs=pl.BlockSpec((tm, d_out), lambda i: (i, 0)),
        ),
        compiler_params=pltpu.CompilerParams(
            dimension_semantics=("parallel",)),
    )(x_pad, wh, bh, wo, bo)

    return out[:M].reshape(*lead, d_out)


# ---------------------------------------------------------------------------
# Deterministic parameter init mirroring FCBlock(relu):
#   weights: kaiming_uniform_(nonlinearity='relu'); biases: nn.Linear default.
# Weights stored as (in, out), i.e. y = x @ W + b  (== torch x @ W.T + b).
# ---------------------------------------------------------------------------
def init_fcblock_params(key, layer_dims):
    params = []
    for fan_in, fan_out in zip(layer_dims[:-1], layer_dims[1:]):
        key, kw, kb = jax.random.split(key, 3)
        w_bound = math.sqrt(2.0) * math.sqrt(3.0 / fan_in)   # kaiming uniform, relu gain
        b_bound = 1.0 / math.sqrt(fan_in)                    # torch Linear bias default
        w = jax.random.uniform(kw, (fan_in, fan_out), jnp.float32,
                               minval=-w_bound, maxval=w_bound)
        b = jax.random.uniform(kb, (1, fan_out), jnp.float32,
                               minval=-b_bound, maxval=b_bound)
        params.append((w, b))
    return params


def _ref_mlp_f32(x2d, params):
    h = x2d
    for i, (w, b) in enumerate(params):
        h = h @ w + b.reshape(1, -1)
        if i < len(params) - 1:
            h = jnp.maximum(h, 0.0)
    return h


def _ref_mlp_mixed(x2d, params):
    """Plain-JAX replica of the kernel's mixed precision (bf16 operands, f32 acc)."""
    h = x2d.astype(jnp.bfloat16)
    for i, (w, b) in enumerate(params):
        if i < len(params) - 1:
            acc = jnp.dot(h, w.astype(jnp.bfloat16),
                          preferred_element_type=jnp.float32) + b.reshape(1, -1)
            h = jnp.maximum(acc, 0.0).astype(jnp.bfloat16)
        else:
            h = h.astype(jnp.float32) @ w.astype(jnp.float32) + b.reshape(1, -1)
    return h


if __name__ == "__main__":
    # FCBlock config (matches the bacon RadianceNet usage): in=117, H=32,
    # num_hidden_layers=3, out=1, nonlinearity='relu', outermost_linear=True.
    in_features = 117
    hidden_features = 32
    num_hidden_layers = 3
    out_features = 1
    layer_dims = ([in_features] + [hidden_features] * (num_hidden_layers + 1)
                  + [out_features])

    key = jax.random.PRNGKey(0)
    k_p, k_x, k_x2 = jax.random.split(key, 3)
    params = init_fcblock_params(k_p, layer_dims)

    # Small deterministic 3-D input: batch=2, samples=8.
    B, N = 2, 8
    coords = jax.random.normal(k_x, (B, N, in_features), jnp.float32)

    out = jax.block_until_ready(fcblock_forward(coords, params))
    assert out.shape == (B, N, out_features)

    x2d = coords.reshape(-1, in_features)
    ref_mixed = _ref_mlp_mixed(x2d, params).reshape(B, N, -1)
    ref_f32 = _ref_mlp_f32(x2d, params).reshape(B, N, -1)
    # Tight check vs an identical mixed-precision reference (validates the kernel)
    assert jnp.allclose(out, ref_mixed, atol=1e-3, rtol=1e-3)
    # Loose check vs the full-f32 reference (validates the bf16 approximation)
    assert jnp.allclose(out, ref_f32, atol=1e-1, rtol=1e-1)

    # 2-D input with a row count that is not a multiple of the tile (exercises
    # the padding path, as FCBlock.forward accepts arbitrary leading dims).
    coords2 = jax.random.normal(k_x2, (5, in_features), jnp.float32)
    out2 = jax.block_until_ready(fcblock_forward(coords2, params))
    assert out2.shape == (5, out_features)
    ref2 = _ref_mlp_mixed(coords2, params)
    assert jnp.allclose(out2, ref2, atol=1e-3, rtol=1e-3)

    print("KERNEL_OK")
</pallas_src>

<mosaic_0001>
module attributes {stable_mosaic.version = 11 : i64} {
  func.func @_fcblock_kernel(%arg0: i32, %arg1: memref<16x128xbf16, #tpu.memory_space<vmem>>, %arg2: memref<4x128x128xbf16, #tpu.memory_space<vmem>>, %arg3: memref<4x1x128xf32, #tpu.memory_space<vmem>>, %arg4: memref<1x128xf32, #tpu.memory_space<vmem>>, %arg5: memref<1x1xf32, #tpu.memory_space<vmem>>, %arg6: memref<16x1xf32, #tpu.memory_space<vmem>>) attributes {dimension_semantics = [#tpu.dimension_semantics<parallel>], iteration_bounds = array<i64: 1>, scalar_prefetch = 0 : i64, scratch_operands = 0 : i64, tpu.core_type = #tpu.core_type<tc>, window_params = [{transform_indices = @transform_0, window_bounds = array<i64: 16, 128>}, {pipeline_mode = #tpu.pipeline_mode<synchronous>, transform_indices = @transform_1, window_bounds = array<i64: 4, 128, 128>}, {pipeline_mode = #tpu.pipeline_mode<synchronous>, transform_indices = @transform_2, window_bounds = array<i64: 4, 1, 128>}, {pipeline_mode = #tpu.pipeline_mode<synchronous>, transform_indices = @transform_3, window_bounds = array<i64: 1, 128>}, {pipeline_mode = #tpu.pipeline_mode<synchronous>, transform_indices = @transform_4, window_bounds = array<i64: 1, 1>}, {transform_indices = @transform_5, window_bounds = array<i64: 16, 1>}]} {
    %c0 = arith.constant 0 : index
    %c0_0 = arith.constant 0 : index
    %0 = vector.load %arg1[%c0, %c0_0] : memref<16x128xbf16, #tpu.memory_space<vmem>>, vector<16x128xbf16>
    %c0_1 = arith.constant 0 : index
    %c0_2 = arith.constant 0 : index
    %c0_3 = arith.constant 0 : index
    %1 = vector.load %arg2[%c0_1, %c0_2, %c0_3] : memref<4x128x128xbf16, #tpu.memory_space<vmem>>, vector<1x128x128xbf16>
    %2 = vector.shape_cast %1 : vector<1x128x128xbf16> to vector<128x128xbf16>
    %cst = arith.constant dense<0.000000e+00> : vector<16x128xf32>
    %3 = tpu.matmul %0, %2, %cst {dimension_numbers = #tpu.dot_dimension_numbers<[1], [0], [0], [1], [0, 0, 1, 1], [], []>} : vector<16x128xbf16>, vector<128x128xbf16>, vector<16x128xf32> -> vector<16x128xf32>
    %c0_4 = arith.constant 0 : index
    %c0_5 = arith.constant 0 : index
    %c0_6 = arith.constant 0 : index
    %4 = vector.load %arg3[%c0_4, %c0_5, %c0_6] : memref<4x1x128xf32, #tpu.memory_space<vmem>>, vector<1x1x128xf32>
    %5 = vector.shape_cast %4 : vector<1x1x128xf32> to vector<1x128xf32>
    %6 = vector.broadcast %5 : vector<1x128xf32> to vector<16x128xf32>
    %7 = arith.addf %3, %6 : vector<16x128xf32>
    %cst_7 = arith.constant 0.000000e+00 : f32
    %8 = vector.broadcast %cst_7 : f32 to vector<16x128xf32>
    %9 = arith.maximumf %7, %8 : vector<16x128xf32>
    %10 = arith.truncf %9 : vector<16x128xf32> to vector<16x128xbf16>
    %c1 = arith.constant 1 : index
    %c0_8 = arith.constant 0 : index
    %c0_9 = arith.constant 0 : index
    %11 = vector.load %arg2[%c1, %c0_8, %c0_9] : memref<4x128x128xbf16, #tpu.memory_space<vmem>>, vector<1x128x128xbf16>
    %12 = vector.shape_cast %11 : vector<1x128x128xbf16> to vector<128x128xbf16>
    %cst_10 = arith.constant dense<0.000000e+00> : vector<16x128xf32>
    %13 = tpu.matmul %10, %12, %cst_10 {dimension_numbers = #tpu.dot_dimension_numbers<[1], [0], [0], [1], [0, 0, 1, 1], [], []>} : vector<16x128xbf16>, vector<128x128xbf16>, vector<16x128xf32> -> vector<16x128xf32>
    %c1_11 = arith.constant 1 : index
    %c0_12 = arith.constant 0 : index
    %c0_13 = arith.constant 0 : index
    %14 = vector.load %arg3[%c1_11, %c0_12, %c0_13] : memref<4x1x128xf32, #tpu.memory_space<vmem>>, vector<1x1x128xf32>
    %15 = vector.shape_cast %14 : vector<1x1x128xf32> to vector<1x128xf32>
    %16 = vector.broadcast %15 : vector<1x128xf32> to vector<16x128xf32>
    %17 = arith.addf %13, %16 : vector<16x128xf32>
    %cst_14 = arith.constant 0.000000e+00 : f32
    %18 = vector.broadcast %cst_14 : f32 to vector<16x128xf32>
    %19 = arith.maximumf %17, %18 : vector<16x128xf32>
    %20 = arith.truncf %19 : vector<16x128xf32> to vector<16x128xbf16>
    %c2 = arith.constant 2 : index
    %c0_15 = arith.constant 0 : index
    %c0_16 = arith.constant 0 : index
    %21 = vector.load %arg2[%c2, %c0_15, %c0_16] : memref<4x128x128xbf16, #tpu.memory_space<vmem>>, vector<1x128x128xbf16>
    %22 = vector.shape_cast %21 : vector<1x128x128xbf16> to vector<128x128xbf16>
    %cst_17 = arith.constant dense<0.000000e+00> : vector<16x128xf32>
    %23 = tpu.matmul %20, %22, %cst_17 {dimension_numbers = #tpu.dot_dimension_numbers<[1], [0], [0], [1], [0, 0, 1, 1], [], []>} : vector<16x128xbf16>, vector<128x128xbf16>, vector<16x128xf32> -> vector<16x128xf32>
    %c2_18 = arith.constant 2 : index
    %c0_19 = arith.constant 0 : index
    %c0_20 = arith.constant 0 : index
    %24 = vector.load %arg3[%c2_18, %c0_19, %c0_20] : memref<4x1x128xf32, #tpu.memory_space<vmem>>, vector<1x1x128xf32>
    %25 = vector.shape_cast %24 : vector<1x1x128xf32> to vector<1x128xf32>
    %26 = vector.broadcast %25 : vector<1x128xf32> to vector<16x128xf32>
    %27 = arith.addf %23, %26 : vector<16x128xf32>
    %cst_21 = arith.constant 0.000000e+00 : f32
    %28 = vector.broadcast %cst_21 : f32 to vector<16x128xf32>
    %29 = arith.maximumf %27, %28 : vector<16x128xf32>
    %30 = arith.truncf %29 : vector<16x128xf32> to vector<16x128xbf16>
    %c3 = arith.constant 3 : index
    %c0_22 = arith.constant 0 : index
    %c0_23 = arith.constant 0 : index
    %31 = vector.load %arg2[%c3, %c0_22, %c0_23] : memref<4x128x128xbf16, #tpu.memory_space<vmem>>, vector<1x128x128xbf16>
    %32 = vector.shape_cast %31 : vector<1x128x128xbf16> to vector<128x128xbf16>
    %cst_24 = arith.constant dense<0.000000e+00> : vector<16x128xf32>
    %33 = tpu.matmul %30, %32, %cst_24 {dimension_numbers = #tpu.dot_dimension_numbers<[1], [0], [0], [1], [0, 0, 1, 1], [], []>} : vector<16x128xbf16>, vector<128x128xbf16>, vector<16x128xf32> -> vector<16x128xf32>
    %c3_25 = arith.constant 3 : index
    %c0_26 = arith.constant 0 : index
    %c0_27 = arith.constant 0 : index
    %34 = vector.load %arg3[%c3_25, %c0_26, %c0_27] : memref<4x1x128xf32, #tpu.memory_space<vmem>>, vector<1x1x128xf32>
    %35 = vector.shape_cast %34 : vector<1x1x128xf32> to vector<1x128xf32>
    %36 = vector.broadcast %35 : vector<1x128xf32> to vector<16x128xf32>
    %37 = arith.addf %33, %36 : vector<16x128xf32>
    %cst_28 = arith.constant 0.000000e+00 : f32
    %38 = vector.broadcast %cst_28 : f32 to vector<16x128xf32>
    %39 = arith.maximumf %37, %38 : vector<16x128xf32>
    %40 = arith.truncf %39 : vector<16x128xf32> to vector<16x128xbf16>
    %41 = arith.extf %40 : vector<16x128xbf16> to vector<16x128xf32>
    %c0_29 = arith.constant 0 : index
    %c0_30 = arith.constant 0 : index
    %42 = vector.load %arg4[%c0_29, %c0_30] : memref<1x128xf32, #tpu.memory_space<vmem>>, vector<1x128xf32>
    %43 = vector.broadcast %42 : vector<1x128xf32> to vector<16x128xf32>
    %44 = arith.mulf %41, %43 : vector<16x128xf32>
    %cst_31 = arith.constant dense<0.000000e+00> : vector<16xf32>
    %45 = vector.multi_reduction <add>, %44, %cst_31 [1] : vector<16x128xf32> to vector<16xf32>
    %46 = vector.shape_cast %45 : vector<16xf32> to vector<16x1xf32>
    %c0_32 = arith.constant 0 : index
    %c0_33 = arith.constant 0 : index
    %47 = vector.load %arg5[%c0_32, %c0_33] : memref<1x1xf32, #tpu.memory_space<vmem>>, vector<1x1xf32>
    %48 = vector.broadcast %47 : vector<1x1xf32> to vector<16x1xf32>
    %49 = arith.addf %46, %48 : vector<16x1xf32>
    %c0_34 = arith.constant 0 : index
    %c0_35 = arith.constant 0 : index
    %50 = vector.load %arg6[%c0_34, %c0_35] : memref<16x1xf32, #tpu.memory_space<vmem>>, vector<16x1xf32>
    tpu.vector_store %arg6[%c0_34, %c0_35], %49 {strides = array<i32>} : memref<16x1xf32, #tpu.memory_space<vmem>>, vector<16x1xf32>,
    return
  }
  func.func @transform_0(%arg0: i32) -> (i32, i32) {
    %c0_i32 = arith.constant 0 : i32
    %c0_i32_0 = arith.constant 0 : i32
    return %arg0, %c0_i32 : i32, i32
  }
  func.func @transform_1(%arg0: i32) -> (i32, i32, i32) {
    %c0_i32 = arith.constant 0 : i32
    %c0_i32_0 = arith.constant 0 : i32
    %c0_i32_1 = arith.constant 0 : i32
    %c0_i32_2 = arith.constant 0 : i32
    return %c0_i32, %c0_i32_0, %c0_i32_1 : i32, i32, i32
  }
  func.func @transform_2(%arg0: i32) -> (i32, i32, i32) {
    %c0_i32 = arith.constant 0 : i32
    %c0_i32_0 = arith.constant 0 : i32
    %c0_i32_1 = arith.constant 0 : i32
    %c0_i32_2 = arith.constant 0 : i32
    return %c0_i32, %c0_i32_0, %c0_i32_1 : i32, i32, i32
  }
  func.func @transform_3(%arg0: i32) -> (i32, i32) {
    %c0_i32 = arith.constant 0 : i32
    %c0_i32_0 = arith.constant 0 : i32
    %c0_i32_1 = arith.constant 0 : i32
    return %c0_i32, %c0_i32_0 : i32, i32
  }
  func.func @transform_4(%arg0: i32) -> (i32, i32) {
    %c0_i32 = arith.constant 0 : i32
    %c0_i32_0 = arith.constant 0 : i32
    %c0_i32_1 = arith.constant 0 : i32
    return %c0_i32, %c0_i32_0 : i32, i32
  }
  func.func @transform_5(%arg0: i32) -> (i32, i32) {
    %c0_i32 = arith.constant 0 : i32
    %c0_i32_0 = arith.constant 0 : i32
    return %arg0, %c0_i32 : i32, i32
  }
}

</mosaic_0001>

<llo_original>
// kernel: tpu_custom_call.1
$region0: #{tpu_custom_call.1}
  #allocation0 [shape = 'u32[]', space=smem, size = 0x4, offset = 0x4, fixed_abs, tag = 'smem constant byte address 0x4 - core index']
  #allocation1 [shape = 'u32[144,128]{1,0:T(1,128)}', space=vmem, size = 0x12000, scoped, tag = 'internal scratch']
  #allocation2 [shape = 'f32[1,1]{1,0:T(1,128)S(1)}', space=vmem, size = 0x200, scoped, tag = 'scoped memory for tpu_custom_call.1']
  %s0 = inlined_call_operand.hbm [shape: bf16[16,128], index: 0, kind: input, shape index: {}]
  %s1 = inlined_call_operand.hbm [shape: bf16[4,128,128], index: 1, kind: input, shape index: {}]
  %s2 = inlined_call_operand.vmem [shape: f32[4,1,128], index: 2, kind: input, shape index: {}]
  %s3 = inlined_call_operand.vmem [shape: f32[1,128], index: 3, kind: input, shape index: {}]
  %s4 = inlined_call_operand.<no memory space> [shape: f32[1,1], index: 4, kind: input, shape index: {}]
  %s5 = inlined_call_operand.vmem [shape: f32[16,1], index: 5, kind: output, shape index: {}]
  %s6 = sld [smem:[#allocation0]]
  $region38: #{tpu_custom_call.1} parent=0
    _
  %s8 = ssub.s32 1, %s6
  %s9 = scalar_select 0, %s8, %s6
  %v10 = vstv %s4
  %11 = vst [vmem:[#allocation2] sm:$0x1] %v10
  $region1: #{tpu_custom_call.1} parent=0
    #allocation3 [shape = 'u8[4096]{0}', space=vmem, size = 0x1000, scoped, tag = 'input window, operand 0, single buffered']
    #allocation4 [shape = 's32[1]{0}', space=sflag, size = 0x4, scoped, tag = 'scoped memory for tpu_custom_call.1']
    #allocation5 [shape = 'u8[131072]{0}', space=vmem, size = 0x20000, scoped, tag = 'input window, operand 1, single buffered']
    #allocation6 [shape = 's32[1]{0}', space=sflag, size = 0x4, scoped, tag = 'scoped memory for tpu_custom_call.1']
    %12 = vsyncpa [#allocation4], 0
    %13 = vsyncpa [#allocation6], 0
    // Predicated region
    $region2: #{tpu_custom_call.1} parent=1 // pred_check
      _
    $region3: #{tpu_custom_call.1} parent=1 // pred_check_branch
      %15 = sbr.rel (0) target = $region5
    $region4: #{tpu_custom_call.1} parent=1 // pred_region
      %s17 = ssub.s32 128, 128
      %18 = vsyncadd [#allocation4], %s17
      %s19 = sshll.u32 [#allocation3], 4
      %s20 = int_to_ptr.vmem [resolvable:$true] %s19
      %25 = dma.hbm_to_vmem [thread:$0]  %s0, 128, %s20, [#allocation4], 64, 64, 4
    $region5: #{tpu_custom_call.1} parent=1 // pred_fallthru
      _
    // Predicated region
    $region6: #{tpu_custom_call.1} parent=1 // pred_check
      _
    $region7: #{tpu_custom_call.1} parent=1 // pred_check_branch
      %27 = sbr.rel (0) target = $region9
    $region8: #{tpu_custom_call.1} parent=1 // pred_region
      %s29 = ssub.s32 4096, 4096
      %30 = vsyncadd [#allocation6], %s29
      %s31 = sshll.u32 [#allocation5], 4
      %s32 = int_to_ptr.vmem [resolvable:$true] %s31
      %37 = dma.hbm_to_vmem [thread:$0]  %s1, 4096, %s32, [#allocation6], 64, 64, 4
    $region9: #{tpu_custom_call.1} parent=1 // pred_fallthru
      _
    // Predicated region
    $region10: #{tpu_custom_call.1} parent=1 // pred_check
      _
    $region11: #{tpu_custom_call.1} parent=1 // pred_check_branch
      %39 = sbr.rel (0) target = $region13
    $region12: #{tpu_custom_call.1} parent=1 // pred_region
      _
    $region13: #{tpu_custom_call.1} parent=1 // pred_fallthru
      _
    // Predicated region
    $region14: #{tpu_custom_call.1} parent=1 // pred_check
      _
    $region15: #{tpu_custom_call.1} parent=1 // pred_check_branch
      %41 = sbr.rel (0) target = $region17
    $region16: #{tpu_custom_call.1} parent=1 // pred_region
      _
    $region17: #{tpu_custom_call.1} parent=1 // pred_fallthru
      _
    // Predicated region
    $region18: #{tpu_custom_call.1} parent=1 // pred_check
      _
    $region19: #{tpu_custom_call.1} parent=1 // pred_check_branch
      %43 = sbr.rel (0) target = $region21
    $region20: #{tpu_custom_call.1} parent=1 // pred_region
      _
    $region21: #{tpu_custom_call.1} parent=1 // pred_fallthru
      _
    // Predicated region
    $region22: #{tpu_custom_call.1} parent=1 // pred_check
      _
    $region23: #{tpu_custom_call.1} parent=1 // pred_check_branch
      %45 = sbr.rel (0) target = $region25
    $region24: #{tpu_custom_call.1} parent=1 // pred_region
      %46 = dma.done [#allocation4], 128
    $region25: #{tpu_custom_call.1} parent=1 // pred_fallthru
      _
    // Predicated region
    $region26: #{tpu_custom_call.1} parent=1 // pred_check
      _
    $region27: #{tpu_custom_call.1} parent=1 // pred_check_branch
      %48 = sbr.rel (0) target = $region29
    $region28: #{tpu_custom_call.1} parent=1 // pred_region
      %49 = dma.done [#allocation6], 4096
    $region29: #{tpu_custom_call.1} parent=1 // pred_fallthru
      _
    %v51 = vld [vmem:[#allocation3] sm:$0xf]
    %v52 = vld [vmem:[#allocation3 + $0x4] sm:$0xf]
    %v53 = vld [vmem:[#allocation5] sm:$0xf]
    %v54 = vld [vmem:[#allocation5 + $0x4] sm:$0xf]
    %v55 = vld [vmem:[#allocation5 + $0x8] sm:$0xf]
    %v56 = vld [vmem:[#allocation5 + $0xc] sm:$0xf]
    %v57 = vld [vmem:[#allocation5 + $0x10] sm:$0xf]
    %v58 = vld [vmem:[#allocation5 + $0x14] sm:$0xf]
    %v59 = vld [vmem:[#allocation5 + $0x18] sm:$0xf]
    %v60 = vld [vmem:[#allocation5 + $0x1c] sm:$0xf]
    %v61 = vld [vmem:[#allocation5 + $0x20] sm:$0xf]
    %v62 = vld [vmem:[#allocation5 + $0x24] sm:$0xf]
    %v63 = vld [vmem:[#allocation5 + $0x28] sm:$0xf]
    %v64 = vld [vmem:[#allocation5 + $0x2c] sm:$0xf]
    %v65 = vld [vmem:[#allocation5 + $0x30] sm:$0xf]
    %v66 = vld [vmem:[#allocation5 + $0x34] sm:$0xf]
    %v67 = vld [vmem:[#allocation5 + $0x38] sm:$0xf]
    %v68 = vld [vmem:[#allocation5 + $0x3c] sm:$0xf]
    %v69 = vld [vmem:[%s2] sm:$0x1]
    %v71 = vlaneseq
    %v72 = vshrl.u32 %v71, 7
    %v73 = vsub.s32 0, %v72
    %v74 = vrot.slane %v69, %v73
    %v78 = vunpack.c.l.b16 %v51
    %v79 = vunpack.c.l.b16 %v52
    %v80 = vpack.c.b16 %v79, %v78
    %v98 = vunpack.c.l.b16 %v53
    %v99 = vunpack.c.l.b16 %v54
    %v100 = vunpack.c.l.b16 %v55
    %v101 = vunpack.c.l.b16 %v56
    %v102 = vunpack.c.l.b16 %v57
    %v103 = vunpack.c.l.b16 %v58
    %v104 = vunpack.c.l.b16 %v59
    %v105 = vunpack.c.l.b16 %v60
    %v106 = vunpack.c.l.b16 %v61
    %v107 = vunpack.c.l.b16 %v62
    %v108 = vunpack.c.l.b16 %v63
    %v109 = vunpack.c.l.b16 %v64
    %v110 = vunpack.c.l.b16 %v65
    %v111 = vunpack.c.l.b16 %v66
    %v112 = vunpack.c.l.b16 %v67
    %v113 = vunpack.c.l.b16 %v68
    %v114 = vpack.c.b16 %v99, %v98
    %v115 = vpack.c.b16 %v101, %v100
    %v116 = vpack.c.b16 %v103, %v102
    %v117 = vpack.c.b16 %v105, %v104
    %v118 = vpack.c.b16 %v107, %v106
    %v119 = vpack.c.b16 %v109, %v108
    %v120 = vpack.c.b16 %v111, %v110
    %v121 = vpack.c.b16 %v113, %v112
    %130 = vmatprep.subr.bf16.mxu0 0
    %131 = vmatpush1.bf16.msra.mxu0 %v121
    %132 = vmatprep.subr.bf16.mxu0 0
    %133 = vmatpush1.bf16.msra.mxu0 %v120
    %134 = vmatprep.subr.bf16.mxu0 0
    %135 = vmatpush1.bf16.msra.mxu0 %v119
    %136 = vmatprep.subr.bf16.mxu0 0
    %137 = vmatpush1.bf16.msra.mxu0 %v118
    %138 = vmatprep.subr.bf16.mxu0 0
    %139 = vmatpush1.bf16.msra.mxu0 %v117
    %140 = vmatprep.subr.bf16.mxu0 0
    %141 = vmatpush1.bf16.msra.mxu0 %v116
    %142 = vmatprep.subr.bf16.mxu0 0
    %143 = vmatpush1.bf16.msra.mxu0 %v115
    %144 = vmatprep.subr.bf16.mxu0 0
    %145 = vmatpush1.bf16.msra.mxu0 %v114
    %146 = vmatprep.subr.bf16.mxu0 0
    %147 = vmatpush2.bf16.msra.mxu0 0
    %148 = vmatprep.subr.bf16.mxu0 0
    %149 = vmatpush2.bf16.msra.mxu0 0
    %150 = vmatprep.subr.bf16.mxu0 0
    %151 = vmatpush2.bf16.msra.mxu0 0
    %152 = vmatprep.subr.bf16.mxu0 0
    %153 = vmatpush2.bf16.msra.mxu0 0
    %154 = vmatprep.subr.bf16.mxu0 0
    %155 = vmatpush2.bf16.msra.mxu0 0
    %156 = vmatprep.subr.bf16.mxu0 0
    %157 = vmatpush2.bf16.msra.mxu0 0
    %158 = vmatprep.subr.bf16.mxu0 0
    %159 = vmatpush2.bf16.msra.mxu0 0
    %160 = vmatprep.subr.bf16.mxu0 0
    %161 = vmatpush2.bf16.msra.mxu0 0
    %162 = vmatprep.mubr.bf16.mxu0 0
    %163 = vmatmul.mubr.bf16.gmra.mxu0 %v80
    %v164 = vpop.f32.mrf.mxu0
    %v165 = vadd.f32 %v74, %v164
    %v166 = vpop.f32.mrf.mxu0
    %v167 = vpop.f32.mrf.mxu0
    %v168 = vadd.f32 %v74, %v167
    %v169 = vpop.f32.mrf.mxu0
    %170 = vdwg.mxu0
    %v171 = vmax.f32 %v165, 0.0
    %v172 = vmax.f32 %v168, 0.0
    %v173 = vpack.c.bf16 %v172, %v171
    %s174 = scalar_lea.vmem [#allocation5], 64
    %v175 = vld [vmem:[%s174] sm:$0xf]
    %v176 = vld [vmem:[%s174 + $0x4] sm:$0xf]
    %v177 = vld [vmem:[%s174 + $0x8] sm:$0xf]
    %v178 = vld [vmem:[%s174 + $0xc] sm:$0xf]
    %v179 = vld [vmem:[%s174 + $0x10] sm:$0xf]
    %v180 = vld [vmem:[%s174 + $0x14] sm:$0xf]
    %v181 = vld [vmem:[%s174 + $0x18] sm:$0xf]
    %v182 = vld [vmem:[%s174 + $0x1c] sm:$0xf]
    %v183 = vld [vmem:[%s174 + $0x20] sm:$0xf]
    %v184 = vld [vmem:[%s174 + $0x24] sm:$0xf]
    %v185 = vld [vmem:[%s174 + $0x28] sm:$0xf]
    %v186 = vld [vmem:[%s174 + $0x2c] sm:$0xf]
    %v187 = vld [vmem:[%s174 + $0x30] sm:$0xf]
    %v188 = vld [vmem:[%s174 + $0x34] sm:$0xf]
    %v189 = vld [vmem:[%s174 + $0x38] sm:$0xf]
    %v190 = vld [vmem:[%s174 + $0x3c] sm:$0xf]
    %s191 = scalar_lea.vmem %s2, 1
    %v192 = vld [vmem:[%s191] sm:$0x1]
    %v194 = vlaneseq
    %v195 = vshrl.u32 %v194, 7
    %v196 = vsub.s32 0, %v195
    %v197 = vrot.slane %v192, %v196
    %v215 = vunpack.c.l.b16 %v175
    %v216 = vunpack.c.l.b16 %v176
    %v217 = vunpack.c.l.b16 %v177
    %v218 = vunpack.c.l.b16 %v178
    %v219 = vunpack.c.l.b16 %v179
    %v220 = vunpack.c.l.b16 %v180
    %v221 = vunpack.c.l.b16 %v181
    %v222 = vunpack.c.l.b16 %v182
    %v223 = vunpack.c.l.b16 %v183
    %v224 = vunpack.c.l.b16 %v184
    %v225 = vunpack.c.l.b16 %v185
    %v226 = vunpack.c.l.b16 %v186
    %v227 = vunpack.c.l.b16 %v187
    %v228 = vunpack.c.l.b16 %v188
    %v229 = vunpack.c.l.b16 %v189
    %v230 = vunpack.c.l.b16 %v190
    %v231 = vpack.c.b16 %v216, %v215
    %v232 = vpack.c.b16 %v218, %v217
    %v233 = vpack.c.b16 %v220, %v219
    %v234 = vpack.c.b16 %v222, %v221
    %v235 = vpack.c.b16 %v224, %v223
    %v236 = vpack.c.b16 %v226, %v225
    %v237 = vpack.c.b16 %v228, %v227
    %v238 = vpack.c.b16 %v230, %v229
    %247 = vmatprep.subr.bf16.mxu0 0
    %248 = vmatpush1.bf16.msra.mxu0 %v238
    %249 = vmatprep.subr.bf16.mxu0 0
    %250 = vmatpush1.bf16.msra.mxu0 %v237
    %251 = vmatprep.subr.bf16.mxu0 0
    %252 = vmatpush1.bf16.msra.mxu0 %v236
    %253 = vmatprep.subr.bf16.mxu0 0
    %254 = vmatpush1.bf16.msra.mxu0 %v235
    %255 = vmatprep.subr.bf16.mxu0 0
    %256 = vmatpush1.bf16.msra.mxu0 %v234
    %257 = vmatprep.subr.bf16.mxu0 0
    %258 = vmatpush1.bf16.msra.mxu0 %v233
    %259 = vmatprep.subr.bf16.mxu0 0
    %260 = vmatpush1.bf16.msra.mxu0 %v232
    %261 = vmatprep.subr.bf16.mxu0 0
    %262 = vmatpush1.bf16.msra.mxu0 %v231
    %263 = vmatprep.subr.bf16.mxu0 0
    %264 = vmatpush2.bf16.msra.mxu0 0
    %265 = vmatprep.subr.bf16.mxu0 0
    %266 = vmatpush2.bf16.msra.mxu0 0
    %267 = vmatprep.subr.bf16.mxu0 0
    %268 = vmatpush2.bf16.msra.mxu0 0
    %269 = vmatprep.subr.bf16.mxu0 0
    %270 = vmatpush2.bf16.msra.mxu0 0
    %271 = vmatprep.subr.bf16.mxu0 0
    %272 = vmatpush2.bf16.msra.mxu0 0
    %273 = vmatprep.subr.bf16.mxu0 0
    %274 = vmatpush2.bf16.msra.mxu0 0
    %275 = vmatprep.subr.bf16.mxu0 0
    %276 = vmatpush2.bf16.msra.mxu0 0
    %277 = vmatprep.subr.bf16.mxu0 0
    %278 = vmatpush2.bf16.msra.mxu0 0
    %279 = vmatprep.mubr.bf16.mxu0 0
    %280 = vmatmul.mubr.bf16.gmra.mxu0 %v173
    %v281 = vpop.f32.mrf.mxu0
    %v282 = vadd.f32 %v197, %v281
    %v283 = vpop.f32.mrf.mxu0
    %v284 = vpop.f32.mrf.mxu0
    %v285 = vadd.f32 %v197, %v284
    %v286 = vpop.f32.mrf.mxu0
    %287 = vdwg.mxu0
    %v288 = vmax.f32 %v282, 0.0
    %v289 = vmax.f32 %v285, 0.0
    %v290 = vpack.c.bf16 %v289, %v288
    %s291 = scalar_lea.vmem [#allocation5], 128
    %v292 = vld [vmem:[%s291] sm:$0xf]
    %v293 = vld [vmem:[%s291 + $0x4] sm:$0xf]
    %v294 = vld [vmem:[%s291 + $0x8] sm:$0xf]
    %v295 = vld [vmem:[%s291 + $0xc] sm:$0xf]
    %v296 = vld [vmem:[%s291 + $0x10] sm:$0xf]
    %v297 = vld [vmem:[%s291 + $0x14] sm:$0xf]
    %v298 = vld [vmem:[%s291 + $0x18] sm:$0xf]
    %v299 = vld [vmem:[%s291 + $0x1c] sm:$0xf]
    %v300 = vld [vmem:[%s291 + $0x20] sm:$0xf]
    %v301 = vld [vmem:[%s291 + $0x24] sm:$0xf]
    %v302 = vld [vmem:[%s291 + $0x28] sm:$0xf]
    %v303 = vld [vmem:[%s291 + $0x2c] sm:$0xf]
    %v304 = vld [vmem:[%s291 + $0x30] sm:$0xf]
    %v305 = vld [vmem:[%s291 + $0x34] sm:$0xf]
    %v306 = vld [vmem:[%s291 + $0x38] sm:$0xf]
    %v307 = vld [vmem:[%s291 + $0x3c] sm:$0xf]
    %s308 = scalar_lea.vmem %s2, 2
    %v309 = vld [vmem:[%s308] sm:$0x1]
    %v311 = vlaneseq
    %v312 = vshrl.u32 %v311, 7
    %v313 = vsub.s32 0, %v312
    %v314 = vrot.slane %v309, %v313
    %v332 = vunpack.c.l.b16 %v292
    %v333 = vunpack.c.l.b16 %v293
    %v334 = vunpack.c.l.b16 %v294
    %v335 = vunpack.c.l.b16 %v295
    %v336 = vunpack.c.l.b16 %v296
    %v337 = vunpack.c.l.b16 %v297
    %v338 = vunpack.c.l.b16 %v298
    %v339 = vunpack.c.l.b16 %v299
    %v340 = vunpack.c.l.b16 %v300
    %v341 = vunpack.c.l.b16 %v301
    %v342 = vunpack.c.l.b16 %v302
    %v343 = vunpack.c.l.b16 %v303
    %v344 = vunpack.c.l.b16 %v304
    %v345 = vunpack.c.l.b16 %v305
    %v346 = vunpack.c.l.b16 %v306
    %v347 = vunpack.c.l.b16 %v307
    %v348 = vpack.c.b16 %v333, %v332
    %v349 = vpack.c.b16 %v335, %v334
    %v350 = vpack.c.b16 %v337, %v336
    %v351 = vpack.c.b16 %v339, %v338
    %v352 = vpack.c.b16 %v341, %v340
    %v353 = vpack.c.b16 %v343, %v342
    %v354 = vpack.c.b16 %v345, %v344
    %v355 = vpack.c.b16 %v347, %v346
    %364 = vmatprep.subr.bf16.mxu0 0
    %365 = vmatpush1.bf16.msra.mxu0 %v355
    %366 = vmatprep.subr.bf16.mxu0 0
    %367 = vmatpush1.bf16.msra.mxu0 %v354
    %368 = vmatprep.subr.bf16.mxu0 0
    %369 = vmatpush1.bf16.msra.mxu0 %v353
    %370 = vmatprep.subr.bf16.mxu0 0
    %371 = vmatpush1.bf16.msra.mxu0 %v352
    %372 = vmatprep.subr.bf16.mxu0 0
    %373 = vmatpush1.bf16.msra.mxu0 %v351
    %374 = vmatprep.subr.bf16.mxu0 0
    %375 = vmatpush1.bf16.msra.mxu0 %v350
    %376 = vmatprep.subr.bf16.mxu0 0
    %377 = vmatpush1.bf16.msra.mxu0 %v349
    %378 = vmatprep.subr.bf16.mxu0 0
    %379 = vmatpush1.bf16.msra.mxu0 %v348
    %380 = vmatprep.subr.bf16.mxu0 0
    %381 = vmatpush2.bf16.msra.mxu0 0
    %382 = vmatprep.subr.bf16.mxu0 0
    %383 = vmatpush2.bf16.msra.mxu0 0
    %384 = vmatprep.subr.bf16.mxu0 0
    %385 = vmatpush2.bf16.msra.mxu0 0
    %386 = vmatprep.subr.bf16.mxu0 0
    %387 = vmatpush2.bf16.msra.mxu0 0
    %388 = vmatprep.subr.bf16.mxu0 0
    %389 = vmatpush2.bf16.msra.mxu0 0
    %390 = vmatprep.subr.bf16.mxu0 0
    %391 = vmatpush2.bf16.msra.mxu0 0
    %392 = vmatprep.subr.bf16.mxu0 0
    %393 = vmatpush2.bf16.msra.mxu0 0
    %394 = vmatprep.subr.bf16.mxu0 0
    %395 = vmatpush2.bf16.msra.mxu0 0
    %396 = vmatprep.mubr.bf16.mxu0 0
    %397 = vmatmul.mubr.bf16.gmra.mxu0 %v290
    %v398 = vpop.f32.mrf.mxu0
    %v399 = vadd.f32 %v314, %v398
    %v400 = vpop.f32.mrf.mxu0
    %v401 = vpop.f32.mrf.mxu0
    %v402 = vadd.f32 %v314, %v401
    %v403 = vpop.f32.mrf.mxu0
    %404 = vdwg.mxu0
    %v405 = vmax.f32 %v399, 0.0
    %v406 = vmax.f32 %v402, 0.0
    %v407 = vpack.c.bf16 %v406, %v405
    %s408 = scalar_lea.vmem [#allocation5], 192
    %v409 = vld [vmem:[%s408] sm:$0xf]
    %v410 = vld [vmem:[%s408 + $0x4] sm:$0xf]
    %v411 = vld [vmem:[%s408 + $0x8] sm:$0xf]
    %v412 = vld [vmem:[%s408 + $0xc] sm:$0xf]
    %v413 = vld [vmem:[%s408 + $0x10] sm:$0xf]
    %v414 = vld [vmem:[%s408 + $0x14] sm:$0xf]
    %v415 = vld [vmem:[%s408 + $0x18] sm:$0xf]
    %v416 = vld [vmem:[%s408 + $0x1c] sm:$0xf]
    %v417 = vld [vmem:[%s408 + $0x20] sm:$0xf]
    %v418 = vld [vmem:[%s408 + $0x24] sm:$0xf]
    %v419 = vld [vmem:[%s408 + $0x28] sm:$0xf]
    %v420 = vld [vmem:[%s408 + $0x2c] sm:$0xf]
    %v421 = vld [vmem:[%s408 + $0x30] sm:$0xf]
    %v422 = vld [vmem:[%s408 + $0x34] sm:$0xf]
    %v423 = vld [vmem:[%s408 + $0x38] sm:$0xf]
    %v424 = vld [vmem:[%s408 + $0x3c] sm:$0xf]
    %s425 = scalar_lea.vmem %s2, 3
    %v426 = vld [vmem:[%s425] sm:$0x1]
    %v428 = vlaneseq
    %v429 = vshrl.u32 %v428, 7
    %v430 = vsub.s32 0, %v429
    %v431 = vrot.slane %v426, %v430
    %v449 = vunpack.c.l.b16 %v409
    %v450 = vunpack.c.l.b16 %v410
    %v451 = vunpack.c.l.b16 %v411
    %v452 = vunpack.c.l.b16 %v412
    %v453 = vunpack.c.l.b16 %v413
    %v454 = vunpack.c.l.b16 %v414
    %v455 = vunpack.c.l.b16 %v415
    %v456 = vunpack.c.l.b16 %v416
    %v457 = vunpack.c.l.b16 %v417
    %v458 = vunpack.c.l.b16 %v418
    %v459 = vunpack.c.l.b16 %v419
    %v460 = vunpack.c.l.b16 %v420
    %v461 = vunpack.c.l.b16 %v421
    %v462 = vunpack.c.l.b16 %v422
    %v463 = vunpack.c.l.b16 %v423
    %v464 = vunpack.c.l.b16 %v424
    %v465 = vpack.c.b16 %v450, %v449
    %v466 = vpack.c.b16 %v452, %v451
    %v467 = vpack.c.b16 %v454, %v453
    %v468 = vpack.c.b16 %v456, %v455
    %v469 = vpack.c.b16 %v458, %v457
    %v470 = vpack.c.b16 %v460, %v459
    %v471 = vpack.c.b16 %v462, %v461
    %v472 = vpack.c.b16 %v464, %v463
    %481 = vmatprep.subr.bf16.mxu0 0
    %482 = vmatpush1.bf16.msra.mxu0 %v472
    %483 = vmatprep.subr.bf16.mxu0 0
    %484 = vmatpush1.bf16.msra.mxu0 %v471
    %485 = vmatprep.subr.bf16.mxu0 0
    %486 = vmatpush1.bf16.msra.mxu0 %v470
    %487 = vmatprep.subr.bf16.mxu0 0
    %488 = vmatpush1.bf16.msra.mxu0 %v469
    %489 = vmatprep.subr.bf16.mxu0 0
    %490 = vmatpush1.bf16.msra.mxu0 %v468
    %491 = vmatprep.subr.bf16.mxu0 0
    %492 = vmatpush1.bf16.msra.mxu0 %v467
    %493 = vmatprep.subr.bf16.mxu0 0
    %494 = vmatpush1.bf16.msra.mxu0 %v466
    %495 = vmatprep.subr.bf16.mxu0 0
    %496 = vmatpush1.bf16.msra.mxu0 %v465
    %497 = vmatprep.subr.bf16.mxu0 0
    %498 = vmatpush2.bf16.msra.mxu0 0
    %499 = vmatprep.subr.bf16.mxu0 0
    %500 = vmatpush2.bf16.msra.mxu0 0
    %501 = vmatprep.subr.bf16.mxu0 0
    %502 = vmatpush2.bf16.msra.mxu0 0
    %503 = vmatprep.subr.bf16.mxu0 0
    %504 = vmatpush2.bf16.msra.mxu0 0
    %505 = vmatprep.subr.bf16.mxu0 0
    %506 = vmatpush2.bf16.msra.mxu0 0
    %507 = vmatprep.subr.bf16.mxu0 0
    %508 = vmatpush2.bf16.msra.mxu0 0
    %509 = vmatprep.subr.bf16.mxu0 0
    %510 = vmatpush2.bf16.msra.mxu0 0
    %511 = vmatprep.subr.bf16.mxu0 0
    %512 = vmatpush2.bf16.msra.mxu0 0
    %513 = vmatprep.mubr.bf16.mxu0 0
    %514 = vmatmul.mubr.bf16.gmra.mxu0 %v407
    %v515 = vpop.f32.mrf.mxu0
    %v516 = vadd.f32 %v431, %v515
    %v517 = vpop.f32.mrf.mxu0
    %v518 = vpop.f32.mrf.mxu0
    %v519 = vadd.f32 %v431, %v518
    %v520 = vpop.f32.mrf.mxu0
    %521 = vdwg.mxu0
    %v522 = vmax.f32 %v516, 0.0
    %v523 = vmax.f32 %v519, 0.0
    %v524 = vpack.c.bf16 %v523, %v522
    %v525 = vunpack.c.l.bf16 %v524
    %v526 = vunpack.c.h.bf16 %v524
    %v527 = vld [vmem:[%s3] sm:$0x1]
    %v529 = vlaneseq
    %v530 = vshrl.u32 %v529, 7
    %v531 = vsub.s32 0, %v530
    %v532 = vrot.slane %v527, %v531
    %v534 = vmul.f32 %v525, %v532
    %v535 = vmul.f32 %v526, %v532
    %536 = vadd.xlane.f32.xlu0 %v534
    %v537 = vpop.xlane.xlu0 %536
    %538 = vadd.xlane.f32.xlu0 %v535
    %v539 = vpop.xlane.xlu0 %538
    %v540 = vld [vmem:[#allocation2] sm:$0x1]
    %v542 = vlaneseq
    %v543 = vshrl.u32 %v542, 7
    %v544 = vsub.s32 0, %v543
    %v545 = vrot.slane %v540, %v544
    %v547 = vadd.f32 %v537, %v545
    %v548 = vadd.f32 %v539, %v545
    %vm549 = vcmask 7168
    %550 = vst.msk [vmem:[%s5] sm:$0xff] %vm549, %v547
    %551 = vst.msk [vmem:[%s5 + $0x8] sm:$0xff] %vm549, %v548
    // Predicated region
    $region30: #{tpu_custom_call.1} parent=1 // pred_check
      _
    $region31: #{tpu_custom_call.1} parent=1 // pred_check_branch
      %553 = sbr.rel (0) target = $region33
    $region32: #{tpu_custom_call.1} parent=1 // pred_region
      _
    $region33: #{tpu_custom_call.1} parent=1 // pred_fallthru
      _
    // Predicated region
    $region34: #{tpu_custom_call.1} parent=1 // pred_check
      _
    $region35: #{tpu_custom_call.1} parent=1 // pred_check_branch
      %555 = sbr.rel (0) target = $region37
    $region36: #{tpu_custom_call.1} parent=1 // pred_region
      _
    $region37: #{tpu_custom_call.1} parent=1 // pred_fallthru
      _
    %556 = vsyncpa [#allocation4], 1
    %557 = vsyncpa [#allocation6], 1

</llo_original>
